<compile_context>
chip_gen: v6e
topology: v6e:2x2x1
jax: 0.10.0
libtpu: 0.0.40
codegen_flags: <defaults>
</compile_context>

<pallas_src>
import functools

import jax
import jax.numpy as jnp
from jax.experimental import pallas as pl
from jax.experimental.pallas import tpu as pltpu


def _round_up(x: int, m: int) -> int:
    return (x + m - 1) // m * m


def _pad_dim(d: int) -> int:
    """Padded extent for a lane (K/N) dim: 128 for tiny dims, else a 256
    multiple so tiles are MXU-aligned on v6e/v7x and never fall back to 128."""
    return 128 if d <= 128 else _round_up(d, 256)


def _tile_for(padded: int) -> int:
    """Largest MXU/lane-aligned tile in {512, 256, 128} dividing `padded`."""
    for t in (512, 256, 128):
        if padded % t == 0:
            return t
    return 128  # unreachable: padded is always a multiple of 128


def _m_blocking(batch: int):
    """(padded_M, tile_M).  batch <= 512: full-dim block, no M pad, no grid
    steps over M.  Larger batches: biggest tile whose pad waste is <= 12.5%."""
    if batch <= 512:
        return batch, batch
    for t in (512, 256, 128):
        mp = _round_up(batch, t)
        if (mp - batch) * 8 <= batch:
            return mp, t
    return _round_up(batch, 128), 128


def prepare_readout_params(w_self, w_cross, bias, *, compute_dtype=jnp.bfloat16):
    """One-time parameter prep (init / weight-load time, NOT per step).

    Folds the two weight matrices in f32, transposes to (input_dim, output_dim),
    zero-pads K/N, then casts to `compute_dtype` (bf16 by default).

    Args:
      w_self, w_cross: (output_dim, input_dim)
      bias:            (output_dim,)
    Returns:
      w_t_padded: (Kp, Np) compute_dtype
      bias2d:     (1, Np)  float32
    """
    output_dim, input_dim = w_self.shape
    w_t = jnp.transpose(w_self.astype(jnp.float32) + w_cross.astype(jnp.float32))
    kp, np_ = _pad_dim(input_dim), _pad_dim(output_dim)
    w_t_padded = jnp.pad(w_t, ((0, kp - input_dim), (0, np_ - output_dim)))
    w_t_padded = w_t_padded.astype(compute_dtype)
    bias2d = jnp.pad(bias.astype(jnp.float32), (0, np_ - output_dim)).reshape(1, np_)
    return w_t_padded, bias2d


def _readout_kernel(x_ref, w_ref, b_ref, o_ref):
    # x: (tm, tk)   w: (tk, tn)   b: (1, tn) f32   o: (tm, tn) f32,
    # resident in VMEM across the k axis (its index_map ignores k).
    k = pl.program_id(2)

    @pl.when(k == 0)
    def _():
        # Seed the resident output tile with the bias: no separate bias pass,
        # no extra f32 accumulator scratch, no writeback copy.
        o_ref[...] = jnp.broadcast_to(b_ref[...], o_ref.shape)

    o_ref[...] += jnp.dot(
        x_ref[...], w_ref[...], preferred_element_type=jnp.float32
    )


@functools.partial(jax.jit, static_argnums=(3,))
def readout_layer(x, w_t_padded, bias2d, output_dim):
    """Pallas equivalent of ReadOutLayer.forward.

    Args:
      x:          (batch, input_dim)
      w_t_padded: (Kp, Np) from prepare_readout_params
      bias2d:     (1, Np)  from prepare_readout_params
      output_dim: logical output dimension (static)
    Returns:
      (batch, output_dim) in x.dtype
    """
    batch, input_dim = x.shape
    kp, np_ = w_t_padded.shape
    tk = _tile_for(kp)
    tn = _tile_for(np_)
    mp, tm = _m_blocking(batch)

    # Only the K pad is strictly required (padded x columns must be real zeros
    # so they meet the zero-padded weight rows without NaNs); M is padded only
    # when batch > 512.  allow_input_fusion lets this pad/cast fuse into the
    # pallas_call operand instead of a standalone HBM pass.
    x_p = jnp.pad(
        x, ((0, mp - batch), (0, kp - input_dim))
    ).astype(w_t_padded.dtype)

    out_padded = pl.pallas_call(
        _readout_kernel,
        out_shape=jax.ShapeDtypeStruct((mp, np_), jnp.float32),
        grid_spec=pltpu.PrefetchScalarGridSpec(
            num_scalar_prefetch=0,
            grid=(mp // tm, np_ // tn, kp // tk),
            in_specs=[
                pl.BlockSpec((tm, tk), lambda i, j, k: (i, k)),
                # TODO(synk): if profiling ever shows exposed weight DMA for a
                # long K axis, add pipeline_mode=pl.Buffered(3) on this spec.
                pl.BlockSpec((tk, tn), lambda i, j, k: (k, j)),
                pl.BlockSpec((1, tn), lambda i, j, k: (0, j)),
            ],
            out_specs=pl.BlockSpec((tm, tn), lambda i, j, k: (i, j)),
        ),
        compiler_params=pltpu.CompilerParams(
            dimension_semantics=("parallel", "parallel", "arbitrary"),
            allow_input_fusion=[True, False, False],
        ),
    )(x_p, w_t_padded, bias2d)

    return out_padded[:batch, :output_dim].astype(x.dtype)


def readout_forward(x, w_t_padded, bias2d, output_dim):
    """Production dispatch: single-tile problems (the module's real shapes) are
    pure pallas launch overhead, so use plain XLA dot on the pre-folded weight;
    multi-tile problems go through the Pallas kernel."""
    batch, input_dim = x.shape
    kp, np_ = w_t_padded.shape
    if batch <= 128 and kp <= 512 and np_ <= 512:
        y = jnp.dot(
            x.astype(w_t_padded.dtype),
            w_t_padded[:input_dim, :output_dim],
            preferred_element_type=jnp.float32,
        )
        return (y + bias2d[0, :output_dim]).astype(x.dtype)
    return readout_layer(x, w_t_padded, bias2d, output_dim)


def _reference(x, w_self, w_cross, bias):
    return x @ w_self.T + x @ w_cross.T + bias


def _rel_err(a, b):
    a = jnp.asarray(a, jnp.float32)
    b = jnp.asarray(b, jnp.float32)
    return float(jnp.linalg.norm(a - b) / (jnp.linalg.norm(b) + 1e-30))


if __name__ == "__main__":
    # ---- Module's real shapes: batch=2, input_dim=[H;C]=32, output_dim=16 ----
    batch, input_dim, output_dim = 2, 32, 16
    key = jax.random.PRNGKey(0)
    kx, kws, kwc = jax.random.split(key, 3)
    x = jax.random.normal(kx, (batch, input_dim), dtype=jnp.float32)
    # nn.Parameter(torch.randn(output_dim, input_dim)) -> standard normal init
    w_self = jax.random.normal(kws, (output_dim, input_dim), dtype=jnp.float32)
    w_cross = jax.random.normal(kwc, (output_dim, input_dim), dtype=jnp.float32)
    # nn.Parameter(torch.zeros(output_dim))
    bias = jnp.zeros((output_dim,), dtype=jnp.float32)

    ref = _reference(x, w_self, w_cross, bias)

    # (a) Pallas path with bf16 folded weights (one-time prep).
    wt_bf16, b2d = prepare_readout_params(w_self, w_cross, bias)
    out = jax.block_until_ready(readout_layer(x, wt_bf16, b2d, output_dim))
    assert out.shape == (batch, output_dim)
    assert _rel_err(out, ref) < 2e-2

    # (b) Dispatcher takes the plain-XLA fast path for this single-tile shape.
    out_d = jax.block_until_ready(readout_forward(x, wt_bf16, b2d, output_dim))
    assert out_d.shape == (batch, output_dim)
    assert _rel_err(out_d, ref) < 2e-2

    # ---- Larger shapes exercising the multi-tile grid + M-padding path ----
    b2, d_in2, d_out2 = 600, 1280, 640     # grid -> (5, 3, 5)
    k2 = jax.random.PRNGKey(1)
    kx2, kws2, kwc2, kb2 = jax.random.split(k2, 4)
    x2 = jax.random.normal(kx2, (b2, d_in2), dtype=jnp.float32)
    ws2 = jax.random.normal(kws2, (d_out2, d_in2), dtype=jnp.float32)
    wc2 = jax.random.normal(kwc2, (d_out2, d_in2), dtype=jnp.float32)
    bias2 = jax.random.normal(kb2, (d_out2,), dtype=jnp.float32)
    ref2 = _reference(x2, ws2, wc2, bias2)

    # f32 weights: kernel must match the exact reference tightly.
    wt_f32, b2d_f32 = prepare_readout_params(
        ws2, wc2, bias2, compute_dtype=jnp.float32
    )
    out2f = jax.block_until_ready(readout_layer(x2, wt_f32, b2d_f32, d_out2))
    assert out2f.shape == (b2, d_out2)
    assert _rel_err(out2f, ref2) < 1e-4

    # bf16 weights: recommended production config.
    wt2_bf16, b2d_bf16 = prepare_readout_params(ws2, wc2, bias2)
    out2b = jax.block_until_ready(readout_layer(x2, wt2_bf16, b2d_bf16, d_out2))
    assert _rel_err(out2b, ref2) < 2e-2

    print("KERNEL_OK")
</pallas_src>

<mosaic_0001>
module attributes {stable_mosaic.version = 11 : i64} {
  func.func @_readout_kernel(%arg0: i32, %arg1: i32, %arg2: i32, %arg3: memref<2x128xbf16, #tpu.memory_space<vmem>>, %arg4: memref<128x128xbf16, #tpu.memory_space<vmem>>, %arg5: memref<1x128xf32, #tpu.memory_space<vmem>>, %arg6: memref<2x128xf32, #tpu.memory_space<vmem>>) attributes {dimension_semantics = [#tpu.dimension_semantics<parallel>, #tpu.dimension_semantics<parallel>, #tpu.dimension_semantics<arbitrary>], iteration_bounds = array<i64: 1, 1, 1>, scalar_prefetch = 0 : i64, scratch_operands = 0 : i64, tpu.core_type = #tpu.core_type<tc>, window_params = [{transform_indices = @transform_0, window_bounds = array<i64: 2, 128>}, {transform_indices = @transform_1, window_bounds = array<i64: 128, 128>}, {transform_indices = @transform_2, window_bounds = array<i64: 1, 128>}, {transform_indices = @transform_3, window_bounds = array<i64: 2, 128>}]} {
    %c0_i32 = arith.constant 0 : i32
    %0 = arith.cmpi eq, %arg2, %c0_i32 : i32
    %1 = arith.extui %0 : i1 to i32
    %c0_i32_0 = arith.constant 0 : i32
    %2 = arith.cmpi ne, %1, %c0_i32_0 : i32
    scf.if %2 {
      %c0_8 = arith.constant 0 : index
      %c0_9 = arith.constant 0 : index
      %9 = vector.load %arg5[%c0_8, %c0_9] : memref<1x128xf32, #tpu.memory_space<vmem>>, vector<1x128xf32>
      %10 = vector.shape_cast %9 : vector<1x128xf32> to vector<1x128xf32>
      %11 = vector.broadcast %10 : vector<1x128xf32> to vector<2x128xf32>
      %c0_10 = arith.constant 0 : index
      %c0_11 = arith.constant 0 : index
      %12 = vector.load %arg6[%c0_10, %c0_11] : memref<2x128xf32, #tpu.memory_space<vmem>>, vector<2x128xf32>
      tpu.vector_store %arg6[%c0_10, %c0_11], %11 {strides = array<i32>} : memref<2x128xf32, #tpu.memory_space<vmem>>, vector<2x128xf32>,
    } else {
    }
    %c0 = arith.constant 0 : index
    %c0_1 = arith.constant 0 : index
    %3 = vector.load %arg6[%c0, %c0_1] : memref<2x128xf32, #tpu.memory_space<vmem>>, vector<2x128xf32>
    %c0_2 = arith.constant 0 : index
    %c0_3 = arith.constant 0 : index
    %4 = vector.load %arg3[%c0_2, %c0_3] : memref<2x128xbf16, #tpu.memory_space<vmem>>, vector<2x128xbf16>
    %c0_4 = arith.constant 0 : index
    %c0_5 = arith.constant 0 : index
    %5 = vector.load %arg4[%c0_4, %c0_5] : memref<128x128xbf16, #tpu.memory_space<vmem>>, vector<128x128xbf16>
    %cst = arith.constant dense<0.000000e+00> : vector<2x128xf32>
    %6 = tpu.matmul %4, %5, %cst {dimension_numbers = #tpu.dot_dimension_numbers<[1], [0], [0], [1], [0, 0, 1, 1], [], []>} : vector<2x128xbf16>, vector<128x128xbf16>, vector<2x128xf32> -> vector<2x128xf32>
    %7 = arith.addf %3, %6 : vector<2x128xf32>
    %c0_6 = arith.constant 0 : index
    %c0_7 = arith.constant 0 : index
    %8 = vector.load %arg6[%c0_6, %c0_7] : memref<2x128xf32, #tpu.memory_space<vmem>>, vector<2x128xf32>
    tpu.vector_store %arg6[%c0_6, %c0_7], %7 {strides = array<i32>} : memref<2x128xf32, #tpu.memory_space<vmem>>, vector<2x128xf32>,
    return
  }
  func.func @transform_0(%arg0: i32, %arg1: i32, %arg2: i32) -> (i32, i32) {
    %c0_i32 = arith.constant 0 : i32
    return %arg0, %arg2 : i32, i32
  }
  func.func @transform_1(%arg0: i32, %arg1: i32, %arg2: i32) -> (i32, i32) {
    %c0_i32 = arith.constant 0 : i32
    return %arg2, %arg1 : i32, i32
  }
  func.func @transform_2(%arg0: i32, %arg1: i32, %arg2: i32) -> (i32, i32) {
    %c0_i32 = arith.constant 0 : i32
    %c0_i32_0 = arith.constant 0 : i32
    return %c0_i32, %arg1 : i32, i32
  }
  func.func @transform_3(%arg0: i32, %arg1: i32, %arg2: i32) -> (i32, i32) {
    %c0_i32 = arith.constant 0 : i32
    return %arg0, %arg1 : i32, i32
  }
}

</mosaic_0001>

<llo_original>
// kernel: readout_layer.2
$region0: #{readout_layer.2}
  #allocation0 [shape = 'u32[]', space=smem, size = 0x4, offset = 0x4, fixed_abs, tag = 'smem constant byte address 0x4 - core index']
  #allocation1 [shape = 'u32[144,128]{1,0:T(1,128)}', space=vmem, size = 0x12000, scoped, tag = 'internal scratch']
  #allocation2 [shape = 'u32[2048]{0}', space=vmem, size = 0x2000, scoped, tag = 'scoped memory for readout_layer.2']
  #allocation3 [shape = 'u32[2048]{0}', space=vmem, size = 0x2000, scoped, tag = 'scoped memory for readout_layer.2']
  #allocation4 [shape = 'u32[2048]{0}', space=vmem, size = 0x2000, scoped, tag = 'scoped memory for readout_layer.2']
  #allocation5 [shape = 'u32[2048]{0}', space=vmem, size = 0x2000, scoped, tag = 'scoped memory for readout_layer.2']
  #allocation6 [shape = 'u32[2048]{0}', space=vmem, size = 0x2000, scoped, tag = 'scoped memory for readout_layer.2']
  %s0 = inlined_call_operand.hbm [shape: bf16[128,128], index: 0, kind: input, shape index: {}]
  %s1 = inlined_call_operand.vmem [shape: f32[1,128], index: 1, kind: input, shape index: {}]
  %s2 = inlined_call_operand.vmem [shape: bf16[2,32], index: 2, kind: input, shape index: {}]
  %s3 = inlined_call_operand.<no memory space> [shape: bf16[], index: 3, kind: input, shape index: {}]
  %s4 = inlined_call_operand.hbm [shape: f32[2,128], index: 4, kind: output, shape index: {}]
  %s5 = sld [smem:[#allocation0]]
  $region30: #{readout_layer.2} parent=0
    _
  %s7 = ssub.s32 1, %s5
  %s8 = scalar_select 0, %s7, %s5
  %v9 = vstv %s3
  %v10 = vunpack.i.l.bf16 %v9
  %v12 = vunpack.i.h.bf16 %v9
  $region1: #{readout_layer.2} parent=0
    #allocation7 [shape = 'u8[32768]{0}', space=vmem, size = 0x8000, scoped, tag = 'input window, operand 1, single buffered']
    #allocation8 [shape = 's32[1]{0}', space=sflag, size = 0x4, scoped, tag = 'scoped memory for readout_layer.2']
    #allocation9 [shape = 's32[1]{0}', space=sflag, size = 0x4, scoped, tag = 'scoped memory for readout_layer.2']
    #allocation10 [shape = 'u8[1024]{0}', space=vmem, size = 0x400, scoped, tag = 'output window, operand 0, single buffered']
    #allocation11 [shape = 'u8[512]{0}', space=vmem, size = 0x400, dematerialized = true, scoped, tag = 'FusionAdapter Buffer %fusion.1 = bf16[2,128]{1,0:T(2,128)(2,1)} fusion(%param_2.1, %param_3), kind=kLoop, calls=%fused_computation.1.clone, metadata={op_name="jit(readout_layer)/jit(_pad)/pad" stack_frame_id=1}']
    %14 = vsyncpa [#allocation8], 0
    %15 = vsyncpa [#allocation9], 0
    // Predicated region
    $region2: #{readout_layer.2} parent=1 // pred_check
      _
    $region3: #{readout_layer.2} parent=1 // pred_check_branch
      %17 = sbr.rel (0) target = $region5
    $region4: #{readout_layer.2} parent=1 // pred_region
      _
    $region5: #{readout_layer.2} parent=1 // pred_fallthru
      _
    // Predicated region
    $region6: #{readout_layer.2} parent=1 // pred_check
      _
    $region7: #{readout_layer.2} parent=1 // pred_check_branch
      %19 = sbr.rel (0) target = $region9
    $region8: #{readout_layer.2} parent=1 // pred_region
      %s21 = ssub.s32 1024, 1024
      %22 = vsyncadd [#allocation8], %s21
      %s23 = sshll.u32 [#allocation7], 4
      %s24 = int_to_ptr.vmem [resolvable:$true] %s23
      %29 = dma.hbm_to_vmem [thread:$0]  %s0, 1024, %s24, [#allocation8], 64, 64, 4
    $region9: #{readout_layer.2} parent=1 // pred_fallthru
      _
    // Predicated region
    $region10: #{readout_layer.2} parent=1 // pred_check
      _
    $region11: #{readout_layer.2} parent=1 // pred_check_branch
      %31 = sbr.rel (0) target = $region13
    $region12: #{readout_layer.2} parent=1 // pred_region
      _
    $region13: #{readout_layer.2} parent=1 // pred_fallthru
      _
    // Predicated region
    $region14: #{readout_layer.2} parent=1 // pred_check
      _
    $region15: #{readout_layer.2} parent=1 // pred_check_branch
      %33 = sbr.rel (0) target = $region17
    $region16: #{readout_layer.2} parent=1 // pred_region
      %34 = dma.done [#allocation8], 1024
    $region17: #{readout_layer.2} parent=1 // pred_fallthru
      _
    %s36 = sor.u32 3, 1
    %s37 = sand.u32 %s36, 1
    %v38 = vld [vmem:[%s2] sm:%s37]
    %v39 = vunpack.c.l.bf16 %v38
    %v40 = vunpack.c.h.bf16 %v38
    %v41 = vlaneseq
    %v42 = vshrl.u32 %v41, 7
    %vm44 = vcmp.lt.s32.totalorder %v42, 2
    %v45 = vsel %vm44, %v39, %v10
    %v46 = vlaneseq
    %v47 = vand.u32 %v46, 127
    %vm49 = vcmp.lt.s32.totalorder %v47, 32
    %v50 = vsel %vm49, %v45, %v10
    %v51 = vpack.c.bf16 0.0, %v50
    %s53 = ssub.s32 2, 1
    %54 = vst [vmem:[#allocation11] sm:%s53] %v51
    %p56 = scmp.eq.s32.totalorder 0, 0
    // Predicated region
    $region18: #{readout_layer.2} parent=1 // pred_check
      %p57 = pneg %p56
    $region19: #{readout_layer.2} parent=1 // pred_check_branch
      %59 = sbr.rel (%p57) target = $region21
    $region20: #{readout_layer.2} parent=1 // pred_region
      %v60 = vld [vmem:[%s1] sm:$0x1]
      %v62 = vlaneseq
      %v63 = vshrl.u32 %v62, 7
      %v64 = vsub.s32 0, %v63
      %v65 = vrot.slane %v60, %v64
      %67 = vst [vmem:[#allocation10] sm:$0x3] %v65
    $region21: #{readout_layer.2} parent=1 // pred_fallthru
      _
    %v68 = vld [vmem:[#allocation10] sm:$0x3]
    %v69 = vld [vmem:[#allocation11] sm:$0x1]
    %v70 = vld [vmem:[#allocation7] sm:$0xf]
    %v71 = vld [vmem:[#allocation7 + $0x4] sm:$0xf]
    %v72 = vld [vmem:[#allocation7 + $0x8] sm:$0xf]
    %v73 = vld [vmem:[#allocation7 + $0xc] sm:$0xf]
    %v74 = vld [vmem:[#allocation7 + $0x10] sm:$0xf]
    %v75 = vld [vmem:[#allocation7 + $0x14] sm:$0xf]
    %v76 = vld [vmem:[#allocation7 + $0x18] sm:$0xf]
    %v77 = vld [vmem:[#allocation7 + $0x1c] sm:$0xf]
    %v78 = vld [vmem:[#allocation7 + $0x20] sm:$0xf]
    %v79 = vld [vmem:[#allocation7 + $0x24] sm:$0xf]
    %v80 = vld [vmem:[#allocation7 + $0x28] sm:$0xf]
    %v81 = vld [vmem:[#allocation7 + $0x2c] sm:$0xf]
    %v82 = vld [vmem:[#allocation7 + $0x30] sm:$0xf]
    %v83 = vld [vmem:[#allocation7 + $0x34] sm:$0xf]
    %v84 = vld [vmem:[#allocation7 + $0x38] sm:$0xf]
    %v85 = vld [vmem:[#allocation7 + $0x3c] sm:$0xf]
    %v102 = vunpack.c.l.b16 %v70
    %v103 = vunpack.c.l.b16 %v71
    %v104 = vunpack.c.l.b16 %v72
    %v105 = vunpack.c.l.b16 %v73
    %v106 = vunpack.c.l.b16 %v74
    %v107 = vunpack.c.l.b16 %v75
    %v108 = vunpack.c.l.b16 %v76
    %v109 = vunpack.c.l.b16 %v77
    %v110 = vunpack.c.l.b16 %v78
    %v111 = vunpack.c.l.b16 %v79
    %v112 = vunpack.c.l.b16 %v80
    %v113 = vunpack.c.l.b16 %v81
    %v114 = vunpack.c.l.b16 %v82
    %v115 = vunpack.c.l.b16 %v83
    %v116 = vunpack.c.l.b16 %v84
    %v117 = vunpack.c.l.b16 %v85
    %v118 = vpack.c.b16 %v103, %v102
    %v119 = vpack.c.b16 %v105, %v104
    %v120 = vpack.c.b16 %v107, %v106
    %v121 = vpack.c.b16 %v109, %v108
    %v122 = vpack.c.b16 %v111, %v110
    %v123 = vpack.c.b16 %v113, %v112
    %v124 = vpack.c.b16 %v115, %v114
    %v125 = vpack.c.b16 %v117, %v116
    %134 = vmatprep.subr.bf16.mxu0 0
    %135 = vmatpush1.bf16.msra.mxu0 %v125
    %136 = vmatprep.subr.bf16.mxu0 0
    %137 = vmatpush1.bf16.msra.mxu0 %v124
    %138 = vmatprep.subr.bf16.mxu0 0
    %139 = vmatpush1.bf16.msra.mxu0 %v123
    %140 = vmatprep.subr.bf16.mxu0 0
    %141 = vmatpush1.bf16.msra.mxu0 %v122
    %142 = vmatprep.subr.bf16.mxu0 0
    %143 = vmatpush1.bf16.msra.mxu0 %v121
    %144 = vmatprep.subr.bf16.mxu0 0
    %145 = vmatpush1.bf16.msra.mxu0 %v120
    %146 = vmatprep.subr.bf16.mxu0 0
    %147 = vmatpush1.bf16.msra.mxu0 %v119
    %148 = vmatprep.subr.bf16.mxu0 0
    %149 = vmatpush1.bf16.msra.mxu0 %v118
    %150 = vmatprep.subr.bf16.mxu0 0
    %151 = vmatpush2.bf16.msra.mxu0 0
    %152 = vmatprep.subr.bf16.mxu0 0
    %153 = vmatpush2.bf16.msra.mxu0 0
    %154 = vmatprep.subr.bf16.mxu0 0
    %155 = vmatpush2.bf16.msra.mxu0 0
    %156 = vmatprep.subr.bf16.mxu0 0
    %157 = vmatpush2.bf16.msra.mxu0 0
    %158 = vmatprep.subr.bf16.mxu0 0
    %159 = vmatpush2.bf16.msra.mxu0 0
    %160 = vmatprep.subr.bf16.mxu0 0
    %161 = vmatpush2.bf16.msra.mxu0 0
    %162 = vmatprep.subr.bf16.mxu0 0
    %163 = vmatpush2.bf16.msra.mxu0 0
    %164 = vmatprep.subr.bf16.mxu0 0
    %165 = vmatpush2.bf16.msra.mxu0 0
    %166 = vmatprep.mubr.bf16.mxu0 0
    %167 = vmatmul.mubr.bf16.gmra.mxu0 %v69
    %v168 = vpop.f32.mrf.mxu0
    %v169 = vadd.f32 0.0, %v168
    %v170 = vpop.f32.mrf.mxu0
    %v171 = vpop.f32.mrf.mxu0
    %v172 = vpop.f32.mrf.mxu0
    %173 = vdwg.mxu0
    %v174 = vadd.f32 %v68, %v169
    %175 = vst [vmem:[#allocation10] sm:$0x3] %v174
    // Predicated region
    $region22: #{readout_layer.2} parent=1 // pred_check
      _
    $region23: #{readout_layer.2} parent=1 // pred_check_branch
      %177 = sbr.rel (0) target = $region25
    $region24: #{readout_layer.2} parent=1 // pred_region
      %s179 = ssub.s32 32, 32
      %180 = vsyncadd [#allocation9], %s179
      %s182 = sshll.u32 [#allocation10], 4
      %s183 = int_to_ptr.vmem [resolvable:$true] %s182
      %185 = dma.vmem_to_hbm [thread:$0]  %s183, 32, %s4, [#allocation9]
    $region25: #{readout_layer.2} parent=1 // pred_fallthru
      _
    // Predicated region
    $region26: #{readout_layer.2} parent=1 // pred_check
      _
    $region27: #{readout_layer.2} parent=1 // pred_check_branch
      %187 = sbr.rel (0) target = $region29
    $region28: #{readout_layer.2} parent=1 // pred_region
      %188 = dma.done [#allocation9], 32
    $region29: #{readout_layer.2} parent=1 // pred_fallthru
      _
    %189 = vsyncpa [#allocation8], 1
    %190 = vsyncpa [#allocation9], 1

</llo_original>
